<compile_context>
chip_gen: v5e
topology: v5e:2x2
jax: 0.10.0
libtpu: 0.0.40
codegen_flags: <defaults>
</compile_context>

<pallas_src>
import jax
import jax.numpy as jnp
from jax import lax
from jax.experimental import pallas as pl
from jax.experimental.pallas import tpu as pltpu


def _round_up(x, m):
    return ((x + m - 1) // m) * m


# ----------------------------------------------------------------------------
# Kernel 1: the serial recurrence   h_{t+1} = (x_t @ W_ih_x + b_ih) + h_t @ W_ih_h
# Grid axis = T-chunks, sequential ("arbitrary"); hidden carried in VMEM scratch.
# ----------------------------------------------------------------------------
def _recurrence_kernel(h0_ref, x_ref, wx_ref, wh_ref, b_ref, hseq_ref, h_carry):
    c = pl.program_id(0)

    # Seed the hidden carry from h0 on the first chunk only.
    @pl.when(c == 0)
    def _():
        h_carry[...] = h0_ref[...]

    tc, bp, ip = x_ref.shape
    hp = h_carry.shape[1]

    # Input projection for the whole chunk: ONE batched matmul (M = Tc*Bp rows),
    # off the serial path.  Bias added once here, not per step.
    x_flat = x_ref[...].reshape(tc * bp, ip)
    xh = jnp.dot(x_flat.astype(wx_ref.dtype), wx_ref[...],
                 preferred_element_type=jnp.float32) + b_ref[...]
    hseq_ref[...] = xh.reshape(tc, bp, hp)

    w_hh = wh_ref[...]

    # Serial part: only the (Bp,Hp)@(Hp,Hp) recurrent matmul per step.
    def step(s, h):
        h_new = hseq_ref[s] + jnp.dot(h.astype(w_hh.dtype), w_hh,
                                      preferred_element_type=jnp.float32)
        hseq_ref[s] = h_new
        return h_new

    h_carry[...] = lax.fori_loop(0, tc, step, h_carry[...], unroll=True)


# ----------------------------------------------------------------------------
# Kernel 2: the output head (i2o, o2o, log_softmax) — no serial dependence, so it
# runs batched over T-chunks with a "parallel" grid axis (both TCs on v7x).
# ----------------------------------------------------------------------------
def _output_kernel(x_ref, hprev_ref, hnew_ref,
                   wiox_ref, wioh_ref, wooh_ref, wooo_ref,
                   bio_ref, boo_ref, out_ref):
    tc, bp, ip = x_ref.shape
    hp = hprev_ref.shape[2]
    op = out_ref.shape[2]
    m = tc * bp

    x = x_ref[...].reshape(m, ip)
    h = hprev_ref[...].reshape(m, hp)    # hidden entering each step
    hn = hnew_ref[...].reshape(m, hp)    # hidden leaving each step

    # output = i2o(cat(x, h))  -- split dots, no concatenate.
    io = (jnp.dot(x.astype(wiox_ref.dtype), wiox_ref[...],
                  preferred_element_type=jnp.float32)
          + jnp.dot(h.astype(wioh_ref.dtype), wioh_ref[...],
                    preferred_element_type=jnp.float32)
          + bio_ref[...])

    # output = o2o(cat(hidden_new, output)); dropout(p=0.1) is identity in eval mode.
    # TODO(synk): training-mode dropout (PRNG mask + 1/(1-p) scale) not implemented.
    logits = (jnp.dot(hn.astype(wooh_ref.dtype), wooh_ref[...],
                      preferred_element_type=jnp.float32)
              + jnp.dot(io.astype(wooo_ref.dtype), wooo_ref[...],
                        preferred_element_type=jnp.float32)
              + boo_ref[...])   # padded lanes of b_oo are -1e30 -> no mask needed

    # log_softmax over the last axis (padded lanes: exp(-huge - max) == 0).
    mx = jnp.max(logits, axis=-1, keepdims=True)
    shifted = logits - mx
    denom = jnp.sum(jnp.exp(shifted), axis=-1, keepdims=True)
    out = shifted - jnp.log(denom)
    out_ref[...] = out.reshape(tc, bp, op)


# ----------------------------------------------------------------------------
# Wrappers
# ----------------------------------------------------------------------------
def rnn_forward_sequence(category, xs, h0, params):
    """Run the RNN cell over T timesteps.

    category: (B, 0) placeholder (n_categories == 0 in the reference module).
    xs:       (T, B, I) per-timestep inputs.
    h0:       (B, H) initial hidden state.
    Returns (log_probs (T, B, O), final_hidden (B, H)).
    """
    assert category.shape[-1] == 0, "n_categories is 0 in the reference module"
    T, B, I = xs.shape
    H = h0.shape[1]
    O = params["output_size"]
    Bp, Ip, Hp, Op = params["Bp"], params["Ip"], params["Hp"], params["Op"]

    Tc = max(1, min(params["Tc"], T))
    T_pad = _round_up(T, Tc)
    n_chunks = T_pad // Tc

    # Zero-pad activations to (sublane=8, lane=128) friendly shapes.
    xs_p = jnp.zeros((T_pad, Bp, Ip), jnp.float32).at[:T, :B, :I].set(xs)
    h0_p = jnp.zeros((Bp, Hp), jnp.float32).at[:B, :H].set(h0)

    cparams = dict(vmem_limit_bytes=32 * 1024 * 1024)

    # ---- Phase 1: serial recurrence -> per-step hidden states ---------------
    hseq = pl.pallas_call(
        _recurrence_kernel,
        out_shape=jax.ShapeDtypeStruct((T_pad, Bp, Hp), jnp.float32),
        grid=(n_chunks,),
        in_specs=[
            pl.BlockSpec((Bp, Hp), lambda c: (0, 0)),            # h0
            pl.BlockSpec((Tc, Bp, Ip), lambda c: (c, 0, 0)),     # x chunk
            pl.BlockSpec((Ip, Hp), lambda c: (0, 0)),            # W_ih (x rows)
            pl.BlockSpec((Hp, Hp), lambda c: (0, 0)),            # W_ih (h rows)
            pl.BlockSpec((1, Hp), lambda c: (0, 0)),             # b_ih
        ],
        out_specs=pl.BlockSpec((Tc, Bp, Hp), lambda c: (c, 0, 0)),
        scratch_shapes=[pltpu.VMEM((Bp, Hp), jnp.float32)],      # hidden carry
        compiler_params=pltpu.CompilerParams(
            dimension_semantics=("arbitrary",), **cparams),       # sequential axis
    )(h0_p, xs_p, params["W_ih_x"], params["W_ih_h"], params["b_ih"])

    # Hidden entering each step: [h0, h_1, ..., h_{T_pad-1}].
    hprev = jnp.concatenate([h0_p[None], hseq[:-1]], axis=0)

    # ---- Phase 2: batched output head (parallel over T-chunks) --------------
    out_p = pl.pallas_call(
        _output_kernel,
        out_shape=jax.ShapeDtypeStruct((T_pad, Bp, Op), jnp.float32),
        grid=(n_chunks,),
        in_specs=[
            pl.BlockSpec((Tc, Bp, Ip), lambda c: (c, 0, 0)),     # x chunk
            pl.BlockSpec((Tc, Bp, Hp), lambda c: (c, 0, 0)),     # h entering step
            pl.BlockSpec((Tc, Bp, Hp), lambda c: (c, 0, 0)),     # h leaving step
            pl.BlockSpec((Ip, Op), lambda c: (0, 0)),            # W_io (x rows)
            pl.BlockSpec((Hp, Op), lambda c: (0, 0)),            # W_io (h rows)
            pl.BlockSpec((Hp, Op), lambda c: (0, 0)),            # W_oo (hidden rows)
            pl.BlockSpec((Op, Op), lambda c: (0, 0)),            # W_oo (output rows)
            pl.BlockSpec((1, Op), lambda c: (0, 0)),             # b_io
            pl.BlockSpec((1, Op), lambda c: (0, 0)),             # b_oo (-1e30 pad)
        ],
        out_specs=pl.BlockSpec((Tc, Bp, Op), lambda c: (c, 0, 0)),
        compiler_params=pltpu.CompilerParams(
            dimension_semantics=("parallel",), **cparams),        # megacore-friendly
    )(xs_p, hprev, hseq,
      params["W_io_x"], params["W_io_h"], params["W_oo_h"], params["W_oo_o"],
      params["b_io"], params["b_oo"])

    return out_p[:T, :B, :O], hseq[T - 1, :B, :H]


def rnn_forward(category, x, h, params):
    """Single-step forward matching the PyTorch module's (output, hidden) API."""
    out_seq, h_new = rnn_forward_sequence(category, x[None], h, params)
    return out_seq[0], h_new


def init_params(key, input_size, hidden_size, output_size, batch_size,
                time_chunk=8, weight_dtype=jnp.float32):
    """nn.Linear-style uniform(-k, k) init, split along the concat boundaries and
    zero-padded so all lane dims are multiples of 128 (batch -> multiple of 8).
    Weights are stored pre-transposed as (in, out).  Padded lanes of b_oo are set
    to -1e30 so log_softmax needs no explicit masking."""
    I, H, O = input_size, hidden_size, output_size
    n_categories = 0
    in1 = n_categories + I + H          # i2h / i2o fan-in
    in2 = H + O                         # o2o fan-in
    k1 = 1.0 / (in1 ** 0.5)
    k2 = 1.0 / (in2 ** 0.5)

    keys = jax.random.split(key, 6)
    w_i2h = jax.random.uniform(keys[0], (in1, H), jnp.float32, -k1, k1)
    b_i2h = jax.random.uniform(keys[1], (H,), jnp.float32, -k1, k1)
    w_i2o = jax.random.uniform(keys[2], (in1, O), jnp.float32, -k1, k1)
    b_i2o = jax.random.uniform(keys[3], (O,), jnp.float32, -k1, k1)
    w_o2o = jax.random.uniform(keys[4], (in2, O), jnp.float32, -k2, k2)
    b_o2o = jax.random.uniform(keys[5], (O,), jnp.float32, -k2, k2)
    raw = dict(w_i2h=w_i2h, b_i2h=b_i2h, w_i2o=w_i2o, b_i2o=b_i2o,
               w_o2o=w_o2o, b_o2o=b_o2o)

    Bp = _round_up(max(batch_size, 8), 8)
    Ip = _round_up(I, 128)
    Hp = _round_up(H, 128)
    Op = _round_up(O, 128)

    dt = weight_dtype
    # i2h split along the cat(x, h) boundary.
    W_ih_x = jnp.zeros((Ip, Hp), dt).at[:I, :H].set(w_i2h[:I].astype(dt))
    W_ih_h = jnp.zeros((Hp, Hp), dt).at[:H, :H].set(w_i2h[I:].astype(dt))
    b_ih = jnp.zeros((1, Hp), jnp.float32).at[0, :H].set(b_i2h)
    # i2o split along the cat(x, h) boundary.
    W_io_x = jnp.zeros((Ip, Op), dt).at[:I, :O].set(w_i2o[:I].astype(dt))
    W_io_h = jnp.zeros((Hp, Op), dt).at[:H, :O].set(w_i2o[I:].astype(dt))
    b_io = jnp.zeros((1, Op), jnp.float32).at[0, :O].set(b_i2o)
    # o2o split along the cat(hidden, output) boundary.
    W_oo_h = jnp.zeros((Hp, Op), dt).at[:H, :O].set(w_o2o[:H].astype(dt))
    W_oo_o = jnp.zeros((Op, Op), dt).at[:O, :O].set(w_o2o[H:].astype(dt))
    # -1e30 (not -inf: avoids inf-inf NaNs) in padded output lanes -> free masking.
    b_oo = jnp.full((1, Op), -1e30, jnp.float32).at[0, :O].set(b_o2o)

    return dict(W_ih_x=W_ih_x, W_ih_h=W_ih_h, b_ih=b_ih,
                W_io_x=W_io_x, W_io_h=W_io_h, b_io=b_io,
                W_oo_h=W_oo_h, W_oo_o=W_oo_o, b_oo=b_oo,
                input_size=I, hidden_size=H, output_size=O,
                Bp=Bp, Ip=Ip, Hp=Hp, Op=Op, Tc=time_chunk, raw=raw)


def reference_forward_sequence(xs, h0, raw):
    """Pure-JAX reference mirroring the PyTorch forward, step by step."""
    hp = jax.lax.Precision.HIGHEST
    outs = []
    h = h0
    for t in range(xs.shape[0]):
        inp = jnp.concatenate([xs[t], h], axis=1)
        hidden = jnp.dot(inp, raw["w_i2h"], precision=hp) + raw["b_i2h"]
        output = jnp.dot(inp, raw["w_i2o"], precision=hp) + raw["b_i2o"]
        comb = jnp.concatenate([hidden, output], axis=1)
        out = jnp.dot(comb, raw["w_o2o"], precision=hp) + raw["b_o2o"]
        outs.append(jax.nn.log_softmax(out, axis=1))
        h = hidden
    return jnp.stack(outs), h


if __name__ == "__main__":
    B, T = 2, 8
    input_size, hidden_size, output_size = 16, 32, 16

    key = jax.random.PRNGKey(0)
    k_param, k_x = jax.random.split(key)
    params = init_params(k_param, input_size, hidden_size, output_size, B,
                         time_chunk=8)

    category = jnp.zeros((B, 0), jnp.float32)               # n_categories == 0
    xs = jax.random.normal(k_x, (T, B, input_size), jnp.float32)
    h0 = jnp.zeros((B, hidden_size), jnp.float32)            # init_hidden() analogue

    out_seq, h_final = rnn_forward_sequence(category, xs, h0, params)
    jax.block_until_ready((out_seq, h_final))

    assert out_seq.shape == (T, B, output_size)
    assert h_final.shape == (B, hidden_size)
    # log_softmax rows must exp-sum to 1
    assert bool(jnp.allclose(jnp.sum(jnp.exp(out_seq), axis=-1), 1.0, atol=1e-5))

    # Numerical check against a pure-JAX step-by-step reference (tolerance allows
    # for MXU f32 matmul rounding over the 8-step recurrence).
    ref_out, ref_h = reference_forward_sequence(xs, h0, params["raw"])
    assert bool(jnp.allclose(out_seq, ref_out, atol=5e-3, rtol=5e-3)), \
        float(jnp.max(jnp.abs(out_seq - ref_out)))
    assert bool(jnp.allclose(h_final, ref_h, atol=5e-3, rtol=5e-3)), \
        float(jnp.max(jnp.abs(h_final - ref_h)))

    # Single-step call matches the PyTorch module's (output, hidden) signature.
    out1, h1 = rnn_forward(category, xs[0], h0, params)
    jax.block_until_ready((out1, h1))
    assert out1.shape == (B, output_size) and h1.shape == (B, hidden_size)

    print("KERNEL_OK")
</pallas_src>

<mosaic_0001>
module attributes {stable_mosaic.version = 11 : i64} {
  func.func @_recurrence_kernel(%arg0: i32, %arg1: memref<8x128xf32, #tpu.memory_space<vmem>>, %arg2: memref<8x8x128xf32, #tpu.memory_space<vmem>>, %arg3: memref<128x128xf32, #tpu.memory_space<vmem>>, %arg4: memref<128x128xf32, #tpu.memory_space<vmem>>, %arg5: memref<1x128xf32, #tpu.memory_space<vmem>>, %arg6: memref<8x8x128xf32, #tpu.memory_space<vmem>>, %arg7: memref<8x128xf32, #tpu.memory_space<vmem>>) attributes {dimension_semantics = [#tpu.dimension_semantics<arbitrary>], iteration_bounds = array<i64: 1>, scalar_prefetch = 0 : i64, scratch_operands = 1 : i64, tpu.core_type = #tpu.core_type<tc>, window_params = [{pipeline_mode = #tpu.pipeline_mode<synchronous>, transform_indices = @transform_0, window_bounds = array<i64: 8, 128>}, {transform_indices = @transform_1, window_bounds = array<i64: 8, 8, 128>}, {pipeline_mode = #tpu.pipeline_mode<synchronous>, transform_indices = @transform_2, window_bounds = array<i64: 128, 128>}, {pipeline_mode = #tpu.pipeline_mode<synchronous>, transform_indices = @transform_3, window_bounds = array<i64: 128, 128>}, {pipeline_mode = #tpu.pipeline_mode<synchronous>, transform_indices = @transform_4, window_bounds = array<i64: 1, 128>}, {transform_indices = @transform_5, window_bounds = array<i64: 8, 8, 128>}]} {
    %c0_i32 = arith.constant 0 : i32
    %0 = arith.cmpi eq, %arg0, %c0_i32 : i32
    %1 = arith.extui %0 : i1 to i32
    %c0_i32_0 = arith.constant 0 : i32
    %2 = arith.cmpi ne, %1, %c0_i32_0 : i32
    scf.if %2 {
      %c0_57 = arith.constant 0 : index
      %c0_58 = arith.constant 0 : index
      %87 = vector.load %arg1[%c0_57, %c0_58] : memref<8x128xf32, #tpu.memory_space<vmem>>, vector<8x128xf32>
      %c0_59 = arith.constant 0 : index
      %c0_60 = arith.constant 0 : index
      %88 = vector.load %arg7[%c0_59, %c0_60] : memref<8x128xf32, #tpu.memory_space<vmem>>, vector<8x128xf32>
      tpu.vector_store %arg7[%c0_59, %c0_60], %87 {strides = array<i32>} : memref<8x128xf32, #tpu.memory_space<vmem>>, vector<8x128xf32>,
    } else {
    }
    %c0 = arith.constant 0 : index
    %c0_1 = arith.constant 0 : index
    %c0_2 = arith.constant 0 : index
    %3 = vector.load %arg2[%c0, %c0_1, %c0_2] : memref<8x8x128xf32, #tpu.memory_space<vmem>>, vector<8x8x128xf32>
    %4 = vector.shape_cast %3 : vector<8x8x128xf32> to vector<64x128xf32>
    %c0_3 = arith.constant 0 : index
    %c0_4 = arith.constant 0 : index
    %5 = vector.load %arg3[%c0_3, %c0_4] : memref<128x128xf32, #tpu.memory_space<vmem>>, vector<128x128xf32>
    %cst = arith.constant dense<0.000000e+00> : vector<64x128xf32>
    %6 = tpu.matmul %4, %5, %cst {dimension_numbers = #tpu.dot_dimension_numbers<[1], [0], [0], [1], [0, 0, 1, 1], [], []>} : vector<64x128xf32>, vector<128x128xf32>, vector<64x128xf32> -> vector<64x128xf32>
    %c0_5 = arith.constant 0 : index
    %c0_6 = arith.constant 0 : index
    %7 = vector.load %arg5[%c0_5, %c0_6] : memref<1x128xf32, #tpu.memory_space<vmem>>, vector<1x128xf32>
    %8 = vector.broadcast %7 : vector<1x128xf32> to vector<64x128xf32>
    %9 = arith.addf %6, %8 : vector<64x128xf32>
    %10 = vector.shape_cast %9 : vector<64x128xf32> to vector<8x8x128xf32>
    %c0_7 = arith.constant 0 : index
    %c0_8 = arith.constant 0 : index
    %c0_9 = arith.constant 0 : index
    %11 = vector.load %arg6[%c0_7, %c0_8, %c0_9] : memref<8x8x128xf32, #tpu.memory_space<vmem>>, vector<8x8x128xf32>
    tpu.vector_store %arg6[%c0_7, %c0_8, %c0_9], %10 {strides = array<i32>} : memref<8x8x128xf32, #tpu.memory_space<vmem>>, vector<8x8x128xf32>,
    %c0_10 = arith.constant 0 : index
    %c0_11 = arith.constant 0 : index
    %12 = vector.load %arg4[%c0_10, %c0_11] : memref<128x128xf32, #tpu.memory_space<vmem>>, vector<128x128xf32>
    %c0_12 = arith.constant 0 : index
    %c0_13 = arith.constant 0 : index
    %13 = vector.load %arg7[%c0_12, %c0_13] : memref<8x128xf32, #tpu.memory_space<vmem>>, vector<8x128xf32>
    %c0_i32_14 = arith.constant 0 : i32
    %14 = arith.index_cast %c0_i32_14 : i32 to index
    %c0_15 = arith.constant 0 : index
    %c0_16 = arith.constant 0 : index
    %15 = vector.load %arg6[%14, %c0_15, %c0_16] : memref<8x8x128xf32, #tpu.memory_space<vmem>>, vector<1x8x128xf32>
    %16 = vector.shape_cast %15 : vector<1x8x128xf32> to vector<8x128xf32>
    %cst_17 = arith.constant dense<0.000000e+00> : vector<8x128xf32>
    %17 = tpu.matmul %13, %12, %cst_17 {dimension_numbers = #tpu.dot_dimension_numbers<[1], [0], [0], [1], [0, 0, 1, 1], [], []>} : vector<8x128xf32>, vector<128x128xf32>, vector<8x128xf32> -> vector<8x128xf32>
    %18 = arith.addf %16, %17 : vector<8x128xf32>
    %19 = arith.index_cast %c0_i32_14 : i32 to index
    %c0_18 = arith.constant 0 : index
    %c0_19 = arith.constant 0 : index
    %20 = vector.load %arg6[%19, %c0_18, %c0_19] : memref<8x8x128xf32, #tpu.memory_space<vmem>>, vector<1x8x128xf32>
    %21 = vector.shape_cast %20 : vector<1x8x128xf32> to vector<8x128xf32>
    %22 = vector.shape_cast %18 : vector<8x128xf32> to vector<1x8x128xf32>
    tpu.vector_store %arg6[%19, %c0_18, %c0_19], %22 {strides = array<i32>} : memref<8x8x128xf32, #tpu.memory_space<vmem>>, vector<1x8x128xf32>,
    %c1_i32 = arith.constant 1 : i32
    %23 = arith.index_cast %c1_i32 : i32 to index
    %c0_20 = arith.constant 0 : index
    %c0_21 = arith.constant 0 : index
    %24 = vector.load %arg6[%23, %c0_20, %c0_21] : memref<8x8x128xf32, #tpu.memory_space<vmem>>, vector<1x8x128xf32>
    %25 = vector.shape_cast %24 : vector<1x8x128xf32> to vector<8x128xf32>
    %cst_22 = arith.constant dense<0.000000e+00> : vector<8x128xf32>
    %26 = tpu.matmul %18, %12, %cst_22 {dimension_numbers = #tpu.dot_dimension_numbers<[1], [0], [0], [1], [0, 0, 1, 1], [], []>} : vector<8x128xf32>, vector<128x128xf32>, vector<8x128xf32> -> vector<8x128xf32>
    %27 = arith.addf %25, %26 : vector<8x128xf32>
    %28 = arith.index_cast %c1_i32 : i32 to index
    %c0_23 = arith.constant 0 : index
    %c0_24 = arith.constant 0 : index
    %29 = vector.load %arg6[%28, %c0_23, %c0_24] : memref<8x8x128xf32, #tpu.memory_space<vmem>>, vector<1x8x128xf32>
    %30 = vector.shape_cast %29 : vector<1x8x128xf32> to vector<8x128xf32>
    %31 = vector.shape_cast %27 : vector<8x128xf32> to vector<1x8x128xf32>
    tpu.vector_store %arg6[%28, %c0_23, %c0_24], %31 {strides = array<i32>} : memref<8x8x128xf32, #tpu.memory_space<vmem>>, vector<1x8x128xf32>,
    %c2_i32 = arith.constant 2 : i32
    %32 = arith.index_cast %c2_i32 : i32 to index
    %c0_25 = arith.constant 0 : index
    %c0_26 = arith.constant 0 : index
    %33 = vector.load %arg6[%32, %c0_25, %c0_26] : memref<8x8x128xf32, #tpu.memory_space<vmem>>, vector<1x8x128xf32>
    %34 = vector.shape_cast %33 : vector<1x8x128xf32> to vector<8x128xf32>
    %cst_27 = arith.constant dense<0.000000e+00> : vector<8x128xf32>
    %35 = tpu.matmul %27, %12, %cst_27 {dimension_numbers = #tpu.dot_dimension_numbers<[1], [0], [0], [1], [0, 0, 1, 1], [], []>} : vector<8x128xf32>, vector<128x128xf32>, vector<8x128xf32> -> vector<8x128xf32>
    %36 = arith.addf %34, %35 : vector<8x128xf32>
    %37 = arith.index_cast %c2_i32 : i32 to index
    %c0_28 = arith.constant 0 : index
    %c0_29 = arith.constant 0 : index
    %38 = vector.load %arg6[%37, %c0_28, %c0_29] : memref<8x8x128xf32, #tpu.memory_space<vmem>>, vector<1x8x128xf32>
    %39 = vector.shape_cast %38 : vector<1x8x128xf32> to vector<8x128xf32>
    %40 = vector.shape_cast %36 : vector<8x128xf32> to vector<1x8x128xf32>
    tpu.vector_store %arg6[%37, %c0_28, %c0_29], %40 {strides = array<i32>} : memref<8x8x128xf32, #tpu.memory_space<vmem>>, vector<1x8x128xf32>,
    %c3_i32 = arith.constant 3 : i32
    %41 = arith.index_cast %c3_i32 : i32 to index
    %c0_30 = arith.constant 0 : index
    %c0_31 = arith.constant 0 : index
    %42 = vector.load %arg6[%41, %c0_30, %c0_31] : memref<8x8x128xf32, #tpu.memory_space<vmem>>, vector<1x8x128xf32>
    %43 = vector.shape_cast %42 : vector<1x8x128xf32> to vector<8x128xf32>
    %cst_32 = arith.constant dense<0.000000e+00> : vector<8x128xf32>
    %44 = tpu.matmul %36, %12, %cst_32 {dimension_numbers = #tpu.dot_dimension_numbers<[1], [0], [0], [1], [0, 0, 1, 1], [], []>} : vector<8x128xf32>, vector<128x128xf32>, vector<8x128xf32> -> vector<8x128xf32>
    %45 = arith.addf %43, %44 : vector<8x128xf32>
    %46 = arith.index_cast %c3_i32 : i32 to index
    %c0_33 = arith.constant 0 : index
    %c0_34 = arith.constant 0 : index
    %47 = vector.load %arg6[%46, %c0_33, %c0_34] : memref<8x8x128xf32, #tpu.memory_space<vmem>>, vector<1x8x128xf32>
    %48 = vector.shape_cast %47 : vector<1x8x128xf32> to vector<8x128xf32>
    %49 = vector.shape_cast %45 : vector<8x128xf32> to vector<1x8x128xf32>
    tpu.vector_store %arg6[%46, %c0_33, %c0_34], %49 {strides = array<i32>} : memref<8x8x128xf32, #tpu.memory_space<vmem>>, vector<1x8x128xf32>,
    %c4_i32 = arith.constant 4 : i32
    %50 = arith.index_cast %c4_i32 : i32 to index
    %c0_35 = arith.constant 0 : index
    %c0_36 = arith.constant 0 : index
    %51 = vector.load %arg6[%50, %c0_35, %c0_36] : memref<8x8x128xf32, #tpu.memory_space<vmem>>, vector<1x8x128xf32>
    %52 = vector.shape_cast %51 : vector<1x8x128xf32> to vector<8x128xf32>
    %cst_37 = arith.constant dense<0.000000e+00> : vector<8x128xf32>
    %53 = tpu.matmul %45, %12, %cst_37 {dimension_numbers = #tpu.dot_dimension_numbers<[1], [0], [0], [1], [0, 0, 1, 1], [], []>} : vector<8x128xf32>, vector<128x128xf32>, vector<8x128xf32> -> vector<8x128xf32>
    %54 = arith.addf %52, %53 : vector<8x128xf32>
    %55 = arith.index_cast %c4_i32 : i32 to index
    %c0_38 = arith.constant 0 : index
    %c0_39 = arith.constant 0 : index
    %56 = vector.load %arg6[%55, %c0_38, %c0_39] : memref<8x8x128xf32, #tpu.memory_space<vmem>>, vector<1x8x128xf32>
    %57 = vector.shape_cast %56 : vector<1x8x128xf32> to vector<8x128xf32>
    %58 = vector.shape_cast %54 : vector<8x128xf32> to vector<1x8x128xf32>
    tpu.vector_store %arg6[%55, %c0_38, %c0_39], %58 {strides = array<i32>} : memref<8x8x128xf32, #tpu.memory_space<vmem>>, vector<1x8x128xf32>,
    %c5_i32 = arith.constant 5 : i32
    %59 = arith.index_cast %c5_i32 : i32 to index
    %c0_40 = arith.constant 0 : index
    %c0_41 = arith.constant 0 : index
    %60 = vector.load %arg6[%59, %c0_40, %c0_41] : memref<8x8x128xf32, #tpu.memory_space<vmem>>, vector<1x8x128xf32>
    %61 = vector.shape_cast %60 : vector<1x8x128xf32> to vector<8x128xf32>
    %cst_42 = arith.constant dense<0.000000e+00> : vector<8x128xf32>
    %62 = tpu.matmul %54, %12, %cst_42 {dimension_numbers = #tpu.dot_dimension_numbers<[1], [0], [0], [1], [0, 0, 1, 1], [], []>} : vector<8x128xf32>, vector<128x128xf32>, vector<8x128xf32> -> vector<8x128xf32>
    %63 = arith.addf %61, %62 : vector<8x128xf32>
    %64 = arith.index_cast %c5_i32 : i32 to index
    %c0_43 = arith.constant 0 : index
    %c0_44 = arith.constant 0 : index
    %65 = vector.load %arg6[%64, %c0_43, %c0_44] : memref<8x8x128xf32, #tpu.memory_space<vmem>>, vector<1x8x128xf32>
    %66 = vector.shape_cast %65 : vector<1x8x128xf32> to vector<8x128xf32>
    %67 = vector.shape_cast %63 : vector<8x128xf32> to vector<1x8x128xf32>
    tpu.vector_store %arg6[%64, %c0_43, %c0_44], %67 {strides = array<i32>} : memref<8x8x128xf32, #tpu.memory_space<vmem>>, vector<1x8x128xf32>,
    %c6_i32 = arith.constant 6 : i32
    %68 = arith.index_cast %c6_i32 : i32 to index
    %c0_45 = arith.constant 0 : index
    %c0_46 = arith.constant 0 : index
    %69 = vector.load %arg6[%68, %c0_45, %c0_46] : memref<8x8x128xf32, #tpu.memory_space<vmem>>, vector<1x8x128xf32>
    %70 = vector.shape_cast %69 : vector<1x8x128xf32> to vector<8x128xf32>
    %cst_47 = arith.constant dense<0.000000e+00> : vector<8x128xf32>
    %71 = tpu.matmul %63, %12, %cst_47 {dimension_numbers = #tpu.dot_dimension_numbers<[1], [0], [0], [1], [0, 0, 1, 1], [], []>} : vector<8x128xf32>, vector<128x128xf32>, vector<8x128xf32> -> vector<8x128xf32>
    %72 = arith.addf %70, %71 : vector<8x128xf32>
    %73 = arith.index_cast %c6_i32 : i32 to index
    %c0_48 = arith.constant 0 : index
    %c0_49 = arith.constant 0 : index
    %74 = vector.load %arg6[%73, %c0_48, %c0_49] : memref<8x8x128xf32, #tpu.memory_space<vmem>>, vector<1x8x128xf32>
    %75 = vector.shape_cast %74 : vector<1x8x128xf32> to vector<8x128xf32>
    %76 = vector.shape_cast %72 : vector<8x128xf32> to vector<1x8x128xf32>
    tpu.vector_store %arg6[%73, %c0_48, %c0_49], %76 {strides = array<i32>} : memref<8x8x128xf32, #tpu.memory_space<vmem>>, vector<1x8x128xf32>,
    %c7_i32 = arith.constant 7 : i32
    %77 = arith.index_cast %c7_i32 : i32 to index
    %c0_50 = arith.constant 0 : index
    %c0_51 = arith.constant 0 : index
    %78 = vector.load %arg6[%77, %c0_50, %c0_51] : memref<8x8x128xf32, #tpu.memory_space<vmem>>, vector<1x8x128xf32>
    %79 = vector.shape_cast %78 : vector<1x8x128xf32> to vector<8x128xf32>
    %cst_52 = arith.constant dense<0.000000e+00> : vector<8x128xf32>
    %80 = tpu.matmul %72, %12, %cst_52 {dimension_numbers = #tpu.dot_dimension_numbers<[1], [0], [0], [1], [0, 0, 1, 1], [], []>} : vector<8x128xf32>, vector<128x128xf32>, vector<8x128xf32> -> vector<8x128xf32>
    %81 = arith.addf %79, %80 : vector<8x128xf32>
    %82 = arith.index_cast %c7_i32 : i32 to index
    %c0_53 = arith.constant 0 : index
    %c0_54 = arith.constant 0 : index
    %83 = vector.load %arg6[%82, %c0_53, %c0_54] : memref<8x8x128xf32, #tpu.memory_space<vmem>>, vector<1x8x128xf32>
    %84 = vector.shape_cast %83 : vector<1x8x128xf32> to vector<8x128xf32>
    %85 = vector.shape_cast %81 : vector<8x128xf32> to vector<1x8x128xf32>
    tpu.vector_store %arg6[%82, %c0_53, %c0_54], %85 {strides = array<i32>} : memref<8x8x128xf32, #tpu.memory_space<vmem>>, vector<1x8x128xf32>,
    %c8_i32 = arith.constant 8 : i32
    %c0_55 = arith.constant 0 : index
    %c0_56 = arith.constant 0 : index
    %86 = vector.load %arg7[%c0_55, %c0_56] : memref<8x128xf32, #tpu.memory_space<vmem>>, vector<8x128xf32>
    tpu.vector_store %arg7[%c0_55, %c0_56], %81 {strides = array<i32>} : memref<8x128xf32, #tpu.memory_space<vmem>>, vector<8x128xf32>,
    return
  }
  func.func @transform_0(%arg0: i32) -> (i32, i32) {
    %c0_i32 = arith.constant 0 : i32
    %c0_i32_0 = arith.constant 0 : i32
    %c0_i32_1 = arith.constant 0 : i32
    return %c0_i32, %c0_i32_0 : i32, i32
  }
  func.func @transform_1(%arg0: i32) -> (i32, i32, i32) {
    %c0_i32 = arith.constant 0 : i32
    %c0_i32_0 = arith.constant 0 : i32
    %c0_i32_1 = arith.constant 0 : i32
    return %arg0, %c0_i32, %c0_i32_0 : i32, i32, i32
  }
  func.func @transform_2(%arg0: i32) -> (i32, i32) {
    %c0_i32 = arith.constant 0 : i32
    %c0_i32_0 = arith.constant 0 : i32
    %c0_i32_1 = arith.constant 0 : i32
    return %c0_i32, %c0_i32_0 : i32, i32
  }
  func.func @transform_3(%arg0: i32) -> (i32, i32) {
    %c0_i32 = arith.constant 0 : i32
    %c0_i32_0 = arith.constant 0 : i32
    %c0_i32_1 = arith.constant 0 : i32
    return %c0_i32, %c0_i32_0 : i32, i32
  }
  func.func @transform_4(%arg0: i32) -> (i32, i32) {
    %c0_i32 = arith.constant 0 : i32
    %c0_i32_0 = arith.constant 0 : i32
    %c0_i32_1 = arith.constant 0 : i32
    return %c0_i32, %c0_i32_0 : i32, i32
  }
  func.func @transform_5(%arg0: i32) -> (i32, i32, i32) {
    %c0_i32 = arith.constant 0 : i32
    %c0_i32_0 = arith.constant 0 : i32
    %c0_i32_1 = arith.constant 0 : i32
    return %arg0, %c0_i32, %c0_i32_0 : i32, i32, i32
  }
}

</mosaic_0001>

<llo_original>
// kernel: tpu_custom_call.1
$region0: #{tpu_custom_call.1}
  #allocation0 [shape = 'u32[]', space=smem, size = 0x4, offset = 0x4, fixed_abs, tag = 'smem constant byte address 0x4 - core index']
  #allocation1 [shape = 'u32[72,128]{1,0:T(1,128)}', space=vmem, size = 0x9000, scoped, tag = 'internal scratch']
  #allocation2 [shape = 'f32[8,128]{1,0:T(8,128)}', space=vmem, size = 0x1000, scoped, tag = 'scratch operand']
  %s0 = inlined_call_operand.hbm [shape: f32[8,128], index: 0, kind: input, shape index: {}]
  %s1 = inlined_call_operand.hbm [shape: f32[8,8,128], index: 1, kind: input, shape index: {}]
  %s2 = inlined_call_operand.hbm [shape: f32[128,128], index: 2, kind: input, shape index: {}]
  %s3 = inlined_call_operand.hbm [shape: f32[128,128], index: 3, kind: input, shape index: {}]
  %s4 = inlined_call_operand.vmem [shape: f32[1,128], index: 4, kind: input, shape index: {}]
  %s5 = inlined_call_operand.hbm [shape: f32[8,8,128], index: 5, kind: output, shape index: {}]
  %s6 = sld [smem:[#allocation0]]
  $region50: #{tpu_custom_call.1} parent=0
    _
  %s8 = ssub.s32 1, %s6
  %s9 = scalar_select 0, %s8, %s6
  $region1: #{tpu_custom_call.1} parent=0
    #allocation3 [shape = 'u8[4096]{0}', space=vmem, size = 0x1000, scoped, tag = 'input window, operand 0, single buffered']
    #allocation4 [shape = 's32[1]{0}', space=sflag, size = 0x4, scoped, tag = 'scoped memory for tpu_custom_call.1']
    #allocation5 [shape = 's32[1]{0}', space=sflag, size = 0x4, scoped, tag = 'scoped memory for tpu_custom_call.1']
    #allocation6 [shape = 'u8[32768]{0}', space=vmem, size = 0x8000, scoped, tag = 'input window, operand 1, single buffered']
    #allocation7 [shape = 's32[1]{0}', space=sflag, size = 0x4, scoped, tag = 'scoped memory for tpu_custom_call.1']
    #allocation8 [shape = 'u8[65536]{0}', space=vmem, size = 0x10000, scoped, tag = 'input window, operand 2, single buffered']
    #allocation9 [shape = 'u8[65536]{0}', space=vmem, size = 0x10000, scoped, tag = 'input window, operand 3, single buffered']
    #allocation10 [shape = 's32[1]{0}', space=sflag, size = 0x4, scoped, tag = 'scoped memory for tpu_custom_call.1']
    #allocation11 [shape = 'u8[32768]{0}', space=vmem, size = 0x8000, scoped, tag = 'output window, operand 0, single buffered']
    %10 = vsyncpa [#allocation4], 0
    %11 = vsyncpa [#allocation7], 0
    %12 = vsyncpa [#allocation10], 0
    %13 = vsyncpa [#allocation5], 0
    // Predicated region
    $region2: #{tpu_custom_call.1} parent=1 // pred_check
      _
    $region3: #{tpu_custom_call.1} parent=1 // pred_check_branch
      %15 = sbr.rel (0) target = $region5
    $region4: #{tpu_custom_call.1} parent=1 // pred_region
      %17 = vsyncadd [#allocation4], 0
      %s19 = sshll.u32 %s0, 4
      %s20 = int_to_ptr.hbm [resolvable:$true] %s19
      %s21 = sshll.u32 [#allocation3], 4
      %s22 = int_to_ptr.vmem [resolvable:$true] %s21
      %24 = dma.hbm_to_vmem [thread:$0]  %s20, 128, %s22, [#allocation4]
    $region5: #{tpu_custom_call.1} parent=1 // pred_fallthru
      _
    // Predicated region
    $region6: #{tpu_custom_call.1} parent=1 // pred_check
      _
    $region7: #{tpu_custom_call.1} parent=1 // pred_check_branch
      %26 = sbr.rel (0) target = $region9
    $region8: #{tpu_custom_call.1} parent=1 // pred_region
      %28 = vsyncadd [#allocation7], 0
      %s29 = sshll.u32 %s1, 4
      %s30 = int_to_ptr.hbm [resolvable:$true] %s29
      %s31 = sshll.u32 [#allocation6], 4
      %s32 = int_to_ptr.vmem [resolvable:$true] %s31
      %37 = dma.hbm_to_vmem [thread:$0]  %s30, 1024, %s32, [#allocation7], 128, 128, 8
    $region9: #{tpu_custom_call.1} parent=1 // pred_fallthru
      _
    // Predicated region
    $region10: #{tpu_custom_call.1} parent=1 // pred_check
      _
    $region11: #{tpu_custom_call.1} parent=1 // pred_check_branch
      %39 = sbr.rel (0) target = $region13
    $region12: #{tpu_custom_call.1} parent=1 // pred_region
      %41 = vsyncadd [#allocation7], 0
      %s42 = sshll.u32 %s2, 4
      %s43 = int_to_ptr.hbm [resolvable:$true] %s42
      %s44 = sshll.u32 [#allocation8], 4
      %s45 = int_to_ptr.vmem [resolvable:$true] %s44
      %50 = dma.hbm_to_vmem [thread:$0]  %s43, 2048, %s45, [#allocation7], 128, 128, 8
    $region13: #{tpu_custom_call.1} parent=1 // pred_fallthru
      _
    // Predicated region
    $region14: #{tpu_custom_call.1} parent=1 // pred_check
      _
    $region15: #{tpu_custom_call.1} parent=1 // pred_check_branch
      %52 = sbr.rel (0) target = $region17
    $region16: #{tpu_custom_call.1} parent=1 // pred_region
      %54 = vsyncadd [#allocation10], 0
      %s55 = sshll.u32 %s3, 4
      %s56 = int_to_ptr.hbm [resolvable:$true] %s55
      %s57 = sshll.u32 [#allocation9], 4
      %s58 = int_to_ptr.vmem [resolvable:$true] %s57
      %63 = dma.hbm_to_vmem [thread:$0]  %s56, 2048, %s58, [#allocation10], 128, 128, 8
    $region17: #{tpu_custom_call.1} parent=1 // pred_fallthru
      _
    // Predicated region
    $region18: #{tpu_custom_call.1} parent=1 // pred_check
      _
    $region19: #{tpu_custom_call.1} parent=1 // pred_check_branch
      %65 = sbr.rel (0) target = $region21
    $region20: #{tpu_custom_call.1} parent=1 // pred_region
      _
    $region21: #{tpu_custom_call.1} parent=1 // pred_fallthru
      _
    // Predicated region
    $region22: #{tpu_custom_call.1} parent=1 // pred_check
      _
    $region23: #{tpu_custom_call.1} parent=1 // pred_check_branch
      %67 = sbr.rel (0) target = $region25
    $region24: #{tpu_custom_call.1} parent=1 // pred_region
      %69 = dma.done [#allocation4], 128
    $region25: #{tpu_custom_call.1} parent=1 // pred_fallthru
      _
    // Predicated region
    $region26: #{tpu_custom_call.1} parent=1 // pred_check
      _
    $region27: #{tpu_custom_call.1} parent=1 // pred_check_branch
      %71 = sbr.rel (0) target = $region29
    $region28: #{tpu_custom_call.1} parent=1 // pred_region
      %73 = dma.done [#allocation7], 1024
    $region29: #{tpu_custom_call.1} parent=1 // pred_fallthru
      _
    // Predicated region
    $region30: #{tpu_custom_call.1} parent=1 // pred_check
      _
    $region31: #{tpu_custom_call.1} parent=1 // pred_check_branch
      %75 = sbr.rel (0) target = $region33
    $region32: #{tpu_custom_call.1} parent=1 // pred_region
      %77 = dma.done [#allocation7], 2048
    $region33: #{tpu_custom_call.1} parent=1 // pred_fallthru
      _
    // Predicated region
    $region34: #{tpu_custom_call.1} parent=1 // pred_check
      _
    $region35: #{tpu_custom_call.1} parent=1 // pred_check_branch
      %79 = sbr.rel (0) target = $region37
    $region36: #{tpu_custom_call.1} parent=1 // pred_region
      %81 = dma.done [#allocation10], 2048
    $region37: #{tpu_custom_call.1} parent=1 // pred_fallthru
      _
    %p82 = scmp.eq.s32.totalorder 0, 0
    // Predicated region
    $region38: #{tpu_custom_call.1} parent=1 // pred_check
      %p83 = pneg %p82
    $region39: #{tpu_custom_call.1} parent=1 // pred_check_branch
      %85 = sbr.rel (%p83) target = $region41
    $region40: #{tpu_custom_call.1} parent=1 // pred_region
      %v86 = vld [vmem:[#allocation3] sm:$0xff]
      %87 = vst [vmem:[#allocation2] sm:$0xff] %v86
    $region41: #{tpu_custom_call.1} parent=1 // pred_fallthru
      _
    %v88 = vld [vmem:[#allocation6] sm:$0xff]
    %v89 = vld [vmem:[#allocation6 + $0x8] sm:$0xff]
    %v90 = vld [vmem:[#allocation6 + $0x10] sm:$0xff]
    %v91 = vld [vmem:[#allocation6 + $0x18] sm:$0xff]
    %v92 = vld [vmem:[#allocation6 + $0x20] sm:$0xff]
    %v93 = vld [vmem:[#allocation6 + $0x28] sm:$0xff]
    %v94 = vld [vmem:[#allocation6 + $0x30] sm:$0xff]
    %v95 = vld [vmem:[#allocation6 + $0x38] sm:$0xff]
    %v96 = vld [vmem:[#allocation8] sm:$0xff]
    %v97 = vld [vmem:[#allocation8 + $0x8] sm:$0xff]
    %v98 = vld [vmem:[#allocation8 + $0x10] sm:$0xff]
    %v99 = vld [vmem:[#allocation8 + $0x18] sm:$0xff]
    %v100 = vld [vmem:[#allocation8 + $0x20] sm:$0xff]
    %v101 = vld [vmem:[#allocation8 + $0x28] sm:$0xff]
    %v102 = vld [vmem:[#allocation8 + $0x30] sm:$0xff]
    %v103 = vld [vmem:[#allocation8 + $0x38] sm:$0xff]
    %v104 = vld [vmem:[#allocation8 + $0x40] sm:$0xff]
    %v105 = vld [vmem:[#allocation8 + $0x48] sm:$0xff]
    %v106 = vld [vmem:[#allocation8 + $0x50] sm:$0xff]
    %v107 = vld [vmem:[#allocation8 + $0x58] sm:$0xff]
    %v108 = vld [vmem:[#allocation8 + $0x60] sm:$0xff]
    %v109 = vld [vmem:[#allocation8 + $0x68] sm:$0xff]
    %v110 = vld [vmem:[#allocation8 + $0x70] sm:$0xff]
    %v111 = vld [vmem:[#allocation8 + $0x78] sm:$0xff]
    %v112 = vld [vmem:[%s4] sm:$0x1]
    %v114 = vperm.slane %v112, 0
    %116 = vmatpush.msra.mxu0 %v111
    %117 = vmatpush.msra.mxu0 %v110
    %118 = vmatpush.msra.mxu0 %v109
    %119 = vmatpush.msra.mxu0 %v108
    %120 = vmatpush.msra.mxu0 %v107
    %121 = vmatpush.msra.mxu0 %v106
    %122 = vmatpush.msra.mxu0 %v105
    %123 = vmatpush.msra.mxu0 %v104
    %124 = vmatpush.msra.mxu0 %v103
    %125 = vmatpush.msra.mxu0 %v102
    %126 = vmatpush.msra.mxu0 %v101
    %127 = vmatpush.msra.mxu0 %v100
    %128 = vmatpush.msra.mxu0 %v99
    %129 = vmatpush.msra.mxu0 %v98
    %130 = vmatpush.msra.mxu0 %v97
    %131 = vmatpush.msra.mxu0 %v96
    %132 = vmatmul.f32.gmra.mxu0 %v88
    %v133 = vpop.f32.mrf.mxu0
    %v134 = vadd.f32 %v114, %v133
    %135 = vmatmul.f32.gmra.mxu0 %v89
    %v136 = vpop.f32.mrf.mxu0
    %v137 = vadd.f32 %v114, %v136
    %138 = vmatmul.f32.gmra.mxu0 %v90
    %v139 = vpop.f32.mrf.mxu0
    %v140 = vadd.f32 %v114, %v139
    %141 = vmatmul.f32.gmra.mxu0 %v91
    %v142 = vpop.f32.mrf.mxu0
    %v143 = vadd.f32 %v114, %v142
    %144 = vmatmul.f32.gmra.mxu0 %v92
    %v145 = vpop.f32.mrf.mxu0
    %v146 = vadd.f32 %v114, %v145
    %147 = vmatmul.f32.gmra.mxu0 %v93
    %v148 = vpop.f32.mrf.mxu0
    %v149 = vadd.f32 %v114, %v148
    %150 = vmatmul.f32.gmra.mxu0 %v94
    %v151 = vpop.f32.mrf.mxu0
    %v152 = vadd.f32 %v114, %v151
    %153 = vmatmul.f32.gmra.mxu0 %v95
    %v154 = vpop.f32.mrf.mxu0
    %v155 = vadd.f32 %v114, %v154
    %156 = vdwg.mxu0
    %157 = vst [vmem:[#allocation11] sm:$0xff] %v134
    %158 = vst [vmem:[#allocation11 + $0x8] sm:$0xff] %v137
    %159 = vst [vmem:[#allocation11 + $0x10] sm:$0xff] %v140
    %160 = vst [vmem:[#allocation11 + $0x18] sm:$0xff] %v143
    %161 = vst [vmem:[#allocation11 + $0x20] sm:$0xff] %v146
    %162 = vst [vmem:[#allocation11 + $0x28] sm:$0xff] %v149
    %163 = vst [vmem:[#allocation11 + $0x30] sm:$0xff] %v152
    %164 = vst [vmem:[#allocation11 + $0x38] sm:$0xff] %v155
    %v165 = vld [vmem:[#allocation9] sm:$0xff]
    %v166 = vld [vmem:[#allocation9 + $0x8] sm:$0xff]
    %v167 = vld [vmem:[#allocation9 + $0x10] sm:$0xff]
    %v168 = vld [vmem:[#allocation9 + $0x18] sm:$0xff]
    %v169 = vld [vmem:[#allocation9 + $0x20] sm:$0xff]
    %v170 = vld [vmem:[#allocation9 + $0x28] sm:$0xff]
    %v171 = vld [vmem:[#allocation9 + $0x30] sm:$0xff]
    %v172 = vld [vmem:[#allocation9 + $0x38] sm:$0xff]
    %v173 = vld [vmem:[#allocation9 + $0x40] sm:$0xff]
    %v174 = vld [vmem:[#allocation9 + $0x48] sm:$0xff]
    %v175 = vld [vmem:[#allocation9 + $0x50] sm:$0xff]
    %v176 = vld [vmem:[#allocation9 + $0x58] sm:$0xff]
    %v177 = vld [vmem:[#allocation9 + $0x60] sm:$0xff]
    %v178 = vld [vmem:[#allocation9 + $0x68] sm:$0xff]
    %v179 = vld [vmem:[#allocation9 + $0x70] sm:$0xff]
    %v180 = vld [vmem:[#allocation9 + $0x78] sm:$0xff]
    %v181 = vld [vmem:[#allocation2] sm:$0xff]
    %v182 = vld [vmem:[#allocation11] sm:$0xff]
    %183 = vmatpush.msra.mxu0 %v180
    %184 = vmatpush.msra.mxu0 %v179
    %185 = vmatpush.msra.mxu0 %v178
    %186 = vmatpush.msra.mxu0 %v177
    %187 = vmatpush.msra.mxu0 %v176
    %188 = vmatpush.msra.mxu0 %v175
    %189 = vmatpush.msra.mxu0 %v174
    %190 = vmatpush.msra.mxu0 %v173
    %191 = vmatpush.msra.mxu0 %v172
    %192 = vmatpush.msra.mxu0 %v171
    %193 = vmatpush.msra.mxu0 %v170
    %194 = vmatpush.msra.mxu0 %v169
    %195 = vmatpush.msra.mxu0 %v168
    %196 = vmatpush.msra.mxu0 %v167
    %197 = vmatpush.msra.mxu0 %v166
    %198 = vmatpush.msra.mxu0 %v165
    %199 = vmatmul.f32.gmra.mxu0 %v181
    %v200 = vpop.f32.mrf.mxu0
    %v201 = vadd.f32 0.0, %v200
    %202 = vdwg.mxu0
    %v203 = vadd.f32 %v182, %v201
    %204 = vst [vmem:[#allocation11] sm:$0xff] %v203
    %s205 = scalar_lea.vmem [#allocation11], 8
    %v206 = vld [vmem:[%s205] sm:$0xff]
    %207 = vmatpush.msra.mxu0 %v180
    %208 = vmatpush.msra.mxu0 %v179
    %209 = vmatpush.msra.mxu0 %v178
    %210 = vmatpush.msra.mxu0 %v177
    %211 = vmatpush.msra.mxu0 %v176
    %212 = vmatpush.msra.mxu0 %v175
    %213 = vmatpush.msra.mxu0 %v174
    %214 = vmatpush.msra.mxu0 %v173
    %215 = vmatpush.msra.mxu0 %v172
    %216 = vmatpush.msra.mxu0 %v171
    %217 = vmatpush.msra.mxu0 %v170
    %218 = vmatpush.msra.mxu0 %v169
    %219 = vmatpush.msra.mxu0 %v168
    %220 = vmatpush.msra.mxu0 %v167
    %221 = vmatpush.msra.mxu0 %v166
    %222 = vmatpush.msra.mxu0 %v165
    %223 = vmatmul.f32.gmra.mxu0 %v203
    %v224 = vpop.f32.mrf.mxu0
    %v225 = vadd.f32 0.0, %v224
    %226 = vdwg.mxu0
    %v227 = vadd.f32 %v206, %v225
    %228 = vst [vmem:[%s205] sm:$0xff] %v227
    %s229 = scalar_lea.vmem [#allocation11], 16
    %v230 = vld [vmem:[%s229] sm:$0xff]
    %231 = vmatpush.msra.mxu0 %v180
    %232 = vmatpush.msra.mxu0 %v179
    %233 = vmatpush.msra.mxu0 %v178
    %234 = vmatpush.msra.mxu0 %v177
    %235 = vmatpush.msra.mxu0 %v176
    %236 = vmatpush.msra.mxu0 %v175
    %237 = vmatpush.msra.mxu0 %v174
    %238 = vmatpush.msra.mxu0 %v173
    %239 = vmatpush.msra.mxu0 %v172
    %240 = vmatpush.msra.mxu0 %v171
    %241 = vmatpush.msra.mxu0 %v170
    %242 = vmatpush.msra.mxu0 %v169
    %243 = vmatpush.msra.mxu0 %v168
    %244 = vmatpush.msra.mxu0 %v167
    %245 = vmatpush.msra.mxu0 %v166
    %246 = vmatpush.msra.mxu0 %v165
    %247 = vmatmul.f32.gmra.mxu0 %v227
    %v248 = vpop.f32.mrf.mxu0
    %v249 = vadd.f32 0.0, %v248
    %250 = vdwg.mxu0
    %v251 = vadd.f32 %v230, %v249
    %252 = vst [vmem:[%s229] sm:$0xff] %v251
    %s253 = scalar_lea.vmem [#allocation11], 24
    %v254 = vld [vmem:[%s253] sm:$0xff]
    %255 = vmatpush.msra.mxu0 %v180
    %256 = vmatpush.msra.mxu0 %v179
    %257 = vmatpush.msra.mxu0 %v178
    %258 = vmatpush.msra.mxu0 %v177
    %259 = vmatpush.msra.mxu0 %v176
    %260 = vmatpush.msra.mxu0 %v175
    %261 = vmatpush.msra.mxu0 %v174
    %262 = vmatpush.msra.mxu0 %v173
    %263 = vmatpush.msra.mxu0 %v172
    %264 = vmatpush.msra.mxu0 %v171
    %265 = vmatpush.msra.mxu0 %v170
    %266 = vmatpush.msra.mxu0 %v169
    %267 = vmatpush.msra.mxu0 %v168
    %268 = vmatpush.msra.mxu0 %v167
    %269 = vmatpush.msra.mxu0 %v166
    %270 = vmatpush.msra.mxu0 %v165
    %271 = vmatmul.f32.gmra.mxu0 %v251
    %v272 = vpop.f32.mrf.mxu0
    %v273 = vadd.f32 0.0, %v272
    %274 = vdwg.mxu0
    %v275 = vadd.f32 %v254, %v273
    %276 = vst [vmem:[%s253] sm:$0xff] %v275
    %s277 = scalar_lea.vmem [#allocation11], 32
    %v278 = vld [vmem:[%s277] sm:$0xff]
    %279 = vmatpush.msra.mxu0 %v180
    %280 = vmatpush.msra.mxu0 %v179
    %281 = vmatpush.msra.mxu0 %v178
    %282 = vmatpush.msra.mxu0 %v177
    %283 = vmatpush.msra.mxu0 %v176
    %284 = vmatpush.msra.mxu0 %v175
    %285 = vmatpush.msra.mxu0 %v174
    %286 = vmatpush.msra.mxu0 %v173
    %287 = vmatpush.msra.mxu0 %v172
    %288 = vmatpush.msra.mxu0 %v171
    %289 = vmatpush.msra.mxu0 %v170
    %290 = vmatpush.msra.mxu0 %v169
    %291 = vmatpush.msra.mxu0 %v168
    %292 = vmatpush.msra.mxu0 %v167
    %293 = vmatpush.msra.mxu0 %v166
    %294 = vmatpush.msra.mxu0 %v165
    %295 = vmatmul.f32.gmra.mxu0 %v275
    %v296 = vpop.f32.mrf.mxu0
    %v297 = vadd.f32 0.0, %v296
    %298 = vdwg.mxu0
    %v299 = vadd.f32 %v278, %v297
    %300 = vst [vmem:[%s277] sm:$0xff] %v299
    %s301 = scalar_lea.vmem [#allocation11], 40
    %v302 = vld [vmem:[%s301] sm:$0xff]
    %303 = vmatpush.msra.mxu0 %v180
    %304 = vmatpush.msra.mxu0 %v179
    %305 = vmatpush.msra.mxu0 %v178
    %306 = vmatpush.msra.mxu0 %v177
    %307 = vmatpush.msra.mxu0 %v176
    %308 = vmatpush.msra.mxu0 %v175
    %309 = vmatpush.msra.mxu0 %v174
    %310 = vmatpush.msra.mxu0 %v173
    %311 = vmatpush.msra.mxu0 %v172
    %312 = vmatpush.msra.mxu0 %v171
    %313 = vmatpush.msra.mxu0 %v170
    %314 = vmatpush.msra.mxu0 %v169
    %315 = vmatpush.msra.mxu0 %v168
    %316 = vmatpush.msra.mxu0 %v167
    %317 = vmatpush.msra.mxu0 %v166
    %318 = vmatpush.msra.mxu0 %v165
    %319 = vmatmul.f32.gmra.mxu0 %v299
    %v320 = vpop.f32.mrf.mxu0
    %v321 = vadd.f32 0.0, %v320
    %322 = vdwg.mxu0
    %v323 = vadd.f32 %v302, %v321
    %324 = vst [vmem:[%s301] sm:$0xff] %v323
    %s325 = scalar_lea.vmem [#allocation11], 48
    %v326 = vld [vmem:[%s325] sm:$0xff]
    %327 = vmatpush.msra.mxu0 %v180
    %328 = vmatpush.msra.mxu0 %v179
    %329 = vmatpush.msra.mxu0 %v178
    %330 = vmatpush.msra.mxu0 %v177
    %331 = vmatpush.msra.mxu0 %v176
    %332 = vmatpush.msra.mxu0 %v175
    %333 = vmatpush.msra.mxu0 %v174
    %334 = vmatpush.msra.mxu0 %v173
    %335 = vmatpush.msra.mxu0 %v172
    %336 = vmatpush.msra.mxu0 %v171
    %337 = vmatpush.msra.mxu0 %v170
    %338 = vmatpush.msra.mxu0 %v169
    %339 = vmatpush.msra.mxu0 %v168
    %340 = vmatpush.msra.mxu0 %v167
    %341 = vmatpush.msra.mxu0 %v166
    %342 = vmatpush.msra.mxu0 %v165
    %343 = vmatmul.f32.gmra.mxu0 %v323
    %v344 = vpop.f32.mrf.mxu0
    %v345 = vadd.f32 0.0, %v344
    %346 = vdwg.mxu0
    %v347 = vadd.f32 %v326, %v345
    %348 = vst [vmem:[%s325] sm:$0xff] %v347
    %s349 = scalar_lea.vmem [#allocation11], 56
    %v350 = vld [vmem:[%s349] sm:$0xff]
    %351 = vmatpush.msra.mxu0 %v180
    %352 = vmatpush.msra.mxu0 %v179
    %353 = vmatpush.msra.mxu0 %v178
    %354 = vmatpush.msra.mxu0 %v177
    %355 = vmatpush.msra.mxu0 %v176
    %356 = vmatpush.msra.mxu0 %v175
    %357 = vmatpush.msra.mxu0 %v174
    %358 = vmatpush.msra.mxu0 %v173
    %359 = vmatpush.msra.mxu0 %v172
    %360 = vmatpush.msra.mxu0 %v171
    %361 = vmatpush.msra.mxu0 %v170
    %362 = vmatpush.msra.mxu0 %v169
    %363 = vmatpush.msra.mxu0 %v168
    %364 = vmatpush.msra.mxu0 %v167
    %365 = vmatpush.msra.mxu0 %v166
    %366 = vmatpush.msra.mxu0 %v165
    %367 = vmatmul.f32.gmra.mxu0 %v347
    %v368 = vpop.f32.mrf.mxu0
    %v369 = vadd.f32 0.0, %v368
    %370 = vdwg.mxu0
    %v371 = vadd.f32 %v350, %v369
    %372 = vst [vmem:[%s349] sm:$0xff] %v371
    %373 = vst [vmem:[#allocation2] sm:$0xff] %v371
    // Predicated region
    $region42: #{tpu_custom_call.1} parent=1 // pred_check
      _
    $region43: #{tpu_custom_call.1} parent=1 // pred_check_branch
      %375 = sbr.rel (0) target = $region45
    $region44: #{tpu_custom_call.1} parent=1 // pred_region
      %377 = vsyncadd [#allocation5], 0
      %s378 = sshll.u32 [#allocation11], 4
      %s379 = int_to_ptr.vmem [resolvable:$true] %s378
      %s380 = sshll.u32 %s5, 4
      %s381 = int_to_ptr.hbm [resolvable:$true] %s380
      %386 = dma.vmem_to_hbm [thread:$0]  %s379, 1024, %s381, [#allocation5], 128, 128, 8
    $region45: #{tpu_custom_call.1} parent=1 // pred_fallthru
      _
    // Predicated region
    $region46: #{tpu_custom_call.1} parent=1 // pred_check
      _
    $region47: #{tpu_custom_call.1} parent=1 // pred_check_branch
      %388 = sbr.rel (0) target = $region49
    $region48: #{tpu_custom_call.1} parent=1 // pred_region
      %390 = dma.done [#allocation5], 1024
    $region49: #{tpu_custom_call.1} parent=1 // pred_fallthru
      _
    %391 = vsyncpa [#allocation4], 1
    %392 = vsyncpa [#allocation7], 1
    %393 = vsyncpa [#allocation10], 1
    %394 = vsyncpa [#allocation5], 1

</llo_original>
